<compile_context>
chip_gen: v5e
topology: v5e:2x2
jax: 0.10.0
libtpu: 0.0.40
codegen_flags: <defaults>
</compile_context>

<pallas_src>
import math

import jax
import jax.numpy as jnp
from jax.experimental import pallas as pl
from jax.experimental.pallas import tpu as pltpu

# ---------------- problem sizes (small, self-consistent) ----------------
B = 2          # batch
S = 8          # sequence length
E = 32         # embedding_dim
H = 4          # num_heads
HD = E // H    # head dim
FF = 64        # ff_hidden_dim
BS = B * S     # flattened batch*seq rows
EPS = 1e-5     # LayerNorm eps (PyTorch default)
NEG = -1e30    # "-inf" for masked keys


def _matmul_nt(a, b):
    # a @ b.T without materializing a transpose: contract last dims, f32 accum.
    return jax.lax.dot_general(
        a, b, (((1,), (1,)), ((), ())), preferred_element_type=jnp.float32)


def _layernorm(h, gamma, beta):
    mu = jnp.mean(h, axis=-1, keepdims=True)
    var = jnp.mean((h - mu) * (h - mu), axis=-1, keepdims=True)
    return (h - mu) * jax.lax.rsqrt(var + EPS) * gamma + beta


def encoder_block_kernel(x_ref, mask_ref, w_ref, p_ref, out_ref):
    x = x_ref[...]                                   # (BS, E) f32
    x_bf = x.astype(jnp.bfloat16)
    mask = mask_ref[...]                             # (BS, BS) additive f32

    # ---- weight slab: static sublane slices (tile-aligned, free) ---------
    wqkv = w_ref[0:3 * E, :]                         # (96, 32) bf16
    wo = w_ref[3 * E:4 * E, :]                       # (32, 32)
    w1 = w_ref[4 * E:4 * E + FF, :]                  # (64, 32)
    w2t = w_ref[4 * E + FF:4 * E + 2 * FF, :]        # (64, 32) == w2.T

    # ---- param slab: one row per vector parameter -------------------------
    def prow(i, width):
        return p_ref[i:i + 1, :][:, :width]          # (1, width) f32
    bqkv = prow(0, 3 * E)     # (1, 96) fused in-proj bias
    qscl = prow(1, 3 * E)     # (1, 96): 1/sqrt(HD) on q lanes, 1.0 elsewhere
    bo = prow(2, E)
    b1 = prow(3, FF)
    b2 = prow(4, E)
    g1 = prow(5, E)
    beta1 = prow(6, E)
    g2 = prow(7, E)
    beta2 = prow(8, E)

    # ---- fused QKV in-projection on the flattened (BS, E) slab ------------
    qkv = _matmul_nt(x_bf, wqkv)                     # (BS, 96) f32
    qkv = (qkv + bqkv) * qscl                        # bias + fold 1/sqrt(HD) into q

    # ---- head-major relayout: ONE full-slab transpose ---------------------
    qkvT = qkv.T                                     # (96, BS)
    qT = qkvT[0 * E:1 * E, :].reshape(H, HD, BS)     # sublane slices (aligned, free)
    kT = qkvT[1 * E:2 * E, :].reshape(H, HD, BS)
    vT = qkvT[2 * E:3 * E, :].reshape(H, HD, BS)
    # small relayout of q only, so the scores dot stays in the supported
    # NN-batched dot_general form (transposed-LHS form avoided on purpose).
    qh = jnp.swapaxes(qT, 1, 2)                      # (H, BS, HD)

    # ---- attention: all batches*heads in one pair of einsums (f32) --------
    scores = jnp.einsum('hqd,hdk->hqk', qh, kT,
                        preferred_element_type=jnp.float32)   # (H, BS, BS)
    scores = scores + mask[None, :, :]               # block-diag + key padding
    scores = scores - jnp.max(scores, axis=-1, keepdims=True)
    p = jnp.exp(scores)
    p = p * pl.reciprocal(jnp.sum(p, axis=-1, keepdims=True), approx=True)

    ctxT = jnp.einsum('hdk,hqk->hdq', vT, p,
                      preferred_element_type=jnp.float32)     # (H, HD, BS)
    attn = ctxT.reshape(E, BS).T                     # (BS, E)

    # ---- output projection + residual + LayerNorm 1 -----------------------
    attn = _matmul_nt(attn.astype(jnp.bfloat16), wo) + bo
    # TODO(synk): dropout layers are identity here (eval-mode semantics).
    h1 = x + attn
    n1 = _layernorm(h1, g1, beta1)

    # ---- feed-forward ------------------------------------------------------
    f = _matmul_nt(n1.astype(jnp.bfloat16), w1) + b1
    f = jnp.maximum(f, 0.0)
    f = jax.lax.dot_general(f.astype(jnp.bfloat16), w2t,
                            (((1,), (0,)), ((), ())),
                            preferred_element_type=jnp.float32) + b2

    h2 = n1 + f
    out_ref[...] = _layernorm(h2, g2, beta2).astype(out_ref.dtype)


def pack_params(params):
    """Pack all weights into one bf16 slab and all vector params into one f32
    slab (in a real model this is done once at parameter-load time)."""
    bf = lambda w: w.astype(jnp.bfloat16)
    w_slab = jnp.concatenate(
        [bf(params["wqkv"]),        # (96, 32)
         bf(params["wo"]),          # (32, 32)
         bf(params["w1"]),          # (64, 32)
         bf(params["w2"].T)],       # (64, 32)  pre-transposed -> plain NN dot
        axis=0)                                              # (256, 32) bf16

    qscale = jnp.concatenate(
        [jnp.full((E,), 1.0 / math.sqrt(HD), jnp.float32),
         jnp.ones((2 * E,), jnp.float32)])

    def row96(v):
        v = jnp.asarray(v, jnp.float32).reshape(-1)
        return jnp.pad(v, (0, 3 * E - v.shape[0]))

    p_slab = jnp.stack([
        row96(params["bqkv"]), row96(qscale),
        row96(params["bo"]), row96(params["b1"]), row96(params["b2"]),
        row96(params["g1"]), row96(params["beta1"]),
        row96(params["g2"]), row96(params["beta2"]),
    ])                                                       # (9, 96) f32
    return w_slab, p_slab


def build_attn_mask(key_padding_mask):
    """(BS, BS) additive mask: block-diagonal over batches (lets the whole
    batch run as one head-batched einsum) plus the key-padding columns."""
    batch_id = jnp.arange(BS, dtype=jnp.int32) // S
    cross = batch_id[:, None] != batch_id[None, :]
    pad = key_padding_mask.reshape(BS)
    return jnp.where(cross | pad[None, :], jnp.float32(NEG), jnp.float32(0.0))


def transformer_encoder_block(x, key_padding_mask, params):
    """x: (B, S, E) f32, key_padding_mask: (B, S) bool (True = ignore key)."""
    x_flat = x.reshape(BS, E)
    mask = build_attn_mask(key_padding_mask)
    w_slab, p_slab = pack_params(params)

    flops = (2 * BS * E * 3 * E          # fused QKV
             + 2 * 2 * H * HD * BS * BS  # scores + context
             + 2 * BS * E * E            # out projection
             + 2 * 2 * BS * E * FF)      # FFN
    transcendentals = H * BS * BS + H * BS + 2 * BS
    bytes_accessed = (x_flat.size * 4 + mask.size * 4
                      + w_slab.size * 2 + p_slab.size * 4 + BS * E * 4)

    vmem = pl.BlockSpec(memory_space=pltpu.MemorySpace.VMEM)
    out = pl.pallas_call(
        encoder_block_kernel,
        out_shape=jax.ShapeDtypeStruct((BS, E), jnp.float32),
        in_specs=[vmem] * 4,
        out_specs=vmem,
        cost_estimate=pl.CostEstimate(
            flops=flops, transcendentals=transcendentals,
            bytes_accessed=bytes_accessed),
    )(x_flat, mask, w_slab, p_slab)
    return out.reshape(B, S, E)


def reference_block(x, key_padding_mask, params):
    """Pure-JAX f32 reference (same math as PyTorch eval forward)."""
    mask_add = jnp.where(key_padding_mask, NEG, 0.0)[:, None, None, :]  # (B,1,1,S)
    qkv = jnp.einsum('bse,fe->bsf', x, params["wqkv"]) + params["bqkv"][0]
    q, k, v = jnp.split(qkv, 3, axis=-1)

    def split_heads(t):
        return t.reshape(B, S, H, HD).transpose(0, 2, 1, 3)

    q, k, v = split_heads(q), split_heads(k), split_heads(v)
    scores = jnp.einsum('bhqd,bhkd->bhqk', q, k) / math.sqrt(HD) + mask_add
    p = jax.nn.softmax(scores, axis=-1)
    attn = jnp.einsum('bhqk,bhkd->bhqd', p, v).transpose(0, 2, 1, 3).reshape(B, S, E)
    attn = jnp.einsum('bse,fe->bsf', attn, params["wo"]) + params["bo"][0]

    def ln(h, g, b):
        mu = h.mean(-1, keepdims=True)
        var = ((h - mu) ** 2).mean(-1, keepdims=True)
        return (h - mu) / jnp.sqrt(var + EPS) * g[0] + b[0]

    h1 = ln(x + attn, params["g1"], params["beta1"])
    f = jax.nn.relu(jnp.einsum('bse,fe->bsf', h1, params["w1"]) + params["b1"][0])
    f = jnp.einsum('bsf,ef->bse', f, params["w2"]) + params["b2"][0]
    return ln(h1 + f, params["g2"], params["beta2"])


def make_params(key):
    ks = jax.random.split(key, 8)
    return {
        "wqkv": 0.1 * jax.random.normal(ks[0], (3 * E, E), jnp.float32),
        "bqkv": 0.05 * jax.random.normal(ks[1], (1, 3 * E), jnp.float32),
        "wo":   0.1 * jax.random.normal(ks[2], (E, E), jnp.float32),
        "bo":   0.05 * jax.random.normal(ks[3], (1, E), jnp.float32),
        "w1":   0.1 * jax.random.normal(ks[4], (FF, E), jnp.float32),
        "b1":   0.05 * jax.random.normal(ks[5], (1, FF), jnp.float32),
        "w2":   0.1 * jax.random.normal(ks[6], (E, FF), jnp.float32),
        "b2":   0.05 * jax.random.normal(ks[7], (1, E), jnp.float32),
        "g1":    jnp.ones((1, E), jnp.float32),
        "beta1": jnp.zeros((1, E), jnp.float32),
        "g2":    jnp.ones((1, E), jnp.float32),
        "beta2": jnp.zeros((1, E), jnp.float32),
    }


if __name__ == "__main__":
    key = jax.random.PRNGKey(0)
    k_x, k_p = jax.random.split(key)
    x = jax.random.normal(k_x, (B, S, E), jnp.float32)
    # key_padding_mask: True = ignore that key position
    key_padding_mask = jnp.array(
        [[False] * S,
         [False] * (S - 2) + [True] * 2], dtype=bool)
    params = make_params(k_p)

    out = transformer_encoder_block(x, key_padding_mask, params)
    out = jax.block_until_ready(out)

    ref = reference_block(x, key_padding_mask, params)
    assert out.shape == (B, S, E)
    err = float(jnp.max(jnp.abs(out - ref)))
    # bf16 matmul operands (f32 accumulation) -> compare at bf16-level tolerance
    assert jnp.allclose(out, ref, atol=2e-2, rtol=2e-2), f"mismatch vs ref, max|d|={err}"
    print("KERNEL_OK")
</pallas_src>

<mosaic_0001>
module attributes {stable_mosaic.version = 11 : i64} {
  func.func @encoder_block_kernel(%arg0: memref<16x32xf32, #tpu.memory_space<vmem>>, %arg1: memref<16x16xf32, #tpu.memory_space<vmem>>, %arg2: memref<256x32xbf16, #tpu.memory_space<vmem>>, %arg3: memref<9x96xf32, #tpu.memory_space<vmem>>, %arg4: memref<16x32xf32, #tpu.memory_space<vmem>>) attributes {dimension_semantics = [], scalar_prefetch = 0 : i64, scratch_operands = 0 : i64, tpu.core_type = #tpu.core_type<tc>} {
    %c0 = arith.constant 0 : index
    %c0_0 = arith.constant 0 : index
    %0 = vector.load %arg0[%c0, %c0_0] : memref<16x32xf32, #tpu.memory_space<vmem>>, vector<16x32xf32>
    %1 = arith.truncf %0 : vector<16x32xf32> to vector<16x32xbf16>
    %c0_1 = arith.constant 0 : index
    %c0_2 = arith.constant 0 : index
    %2 = vector.load %arg1[%c0_1, %c0_2] : memref<16x16xf32, #tpu.memory_space<vmem>>, vector<16x16xf32>
    %c0_3 = arith.constant 0 : index
    %c0_4 = arith.constant 0 : index
    %3 = vector.load %arg2[%c0_3, %c0_4] : memref<256x32xbf16, #tpu.memory_space<vmem>>, vector<96x32xbf16>
    %c96 = arith.constant 96 : index
    %c0_5 = arith.constant 0 : index
    %4 = vector.load %arg2[%c96, %c0_5] : memref<256x32xbf16, #tpu.memory_space<vmem>>, vector<32x32xbf16>
    %c128 = arith.constant 128 : index
    %c0_6 = arith.constant 0 : index
    %5 = vector.load %arg2[%c128, %c0_6] : memref<256x32xbf16, #tpu.memory_space<vmem>>, vector<64x32xbf16>
    %c192 = arith.constant 192 : index
    %c0_7 = arith.constant 0 : index
    %6 = vector.load %arg2[%c192, %c0_7] : memref<256x32xbf16, #tpu.memory_space<vmem>>, vector<64x32xbf16>
    %c0_8 = arith.constant 0 : index
    %c0_9 = arith.constant 0 : index
    %7 = vector.load %arg3[%c0_8, %c0_9] : memref<9x96xf32, #tpu.memory_space<vmem>>, vector<1x96xf32>
    %c1 = arith.constant 1 : index
    %c0_10 = arith.constant 0 : index
    %8 = vector.load %arg3[%c1, %c0_10] : memref<9x96xf32, #tpu.memory_space<vmem>>, vector<1x96xf32>
    %c2 = arith.constant 2 : index
    %c0_11 = arith.constant 0 : index
    %9 = vector.load %arg3[%c2, %c0_11] : memref<9x96xf32, #tpu.memory_space<vmem>>, vector<1x96xf32>
    %10 = vector.extract_strided_slice %9 {offsets = [0, 0], sizes = [1, 32], strides = [1, 1]} : vector<1x96xf32> to vector<1x32xf32>
    %c3 = arith.constant 3 : index
    %c0_12 = arith.constant 0 : index
    %11 = vector.load %arg3[%c3, %c0_12] : memref<9x96xf32, #tpu.memory_space<vmem>>, vector<1x96xf32>
    %12 = vector.extract_strided_slice %11 {offsets = [0, 0], sizes = [1, 64], strides = [1, 1]} : vector<1x96xf32> to vector<1x64xf32>
    %c4 = arith.constant 4 : index
    %c0_13 = arith.constant 0 : index
    %13 = vector.load %arg3[%c4, %c0_13] : memref<9x96xf32, #tpu.memory_space<vmem>>, vector<1x96xf32>
    %14 = vector.extract_strided_slice %13 {offsets = [0, 0], sizes = [1, 32], strides = [1, 1]} : vector<1x96xf32> to vector<1x32xf32>
    %c5 = arith.constant 5 : index
    %c0_14 = arith.constant 0 : index
    %15 = vector.load %arg3[%c5, %c0_14] : memref<9x96xf32, #tpu.memory_space<vmem>>, vector<1x96xf32>
    %16 = vector.extract_strided_slice %15 {offsets = [0, 0], sizes = [1, 32], strides = [1, 1]} : vector<1x96xf32> to vector<1x32xf32>
    %c6 = arith.constant 6 : index
    %c0_15 = arith.constant 0 : index
    %17 = vector.load %arg3[%c6, %c0_15] : memref<9x96xf32, #tpu.memory_space<vmem>>, vector<1x96xf32>
    %18 = vector.extract_strided_slice %17 {offsets = [0, 0], sizes = [1, 32], strides = [1, 1]} : vector<1x96xf32> to vector<1x32xf32>
    %c7 = arith.constant 7 : index
    %c0_16 = arith.constant 0 : index
    %19 = vector.load %arg3[%c7, %c0_16] : memref<9x96xf32, #tpu.memory_space<vmem>>, vector<1x96xf32>
    %20 = vector.extract_strided_slice %19 {offsets = [0, 0], sizes = [1, 32], strides = [1, 1]} : vector<1x96xf32> to vector<1x32xf32>
    %c8 = arith.constant 8 : index
    %c0_17 = arith.constant 0 : index
    %21 = vector.load %arg3[%c8, %c0_17] : memref<9x96xf32, #tpu.memory_space<vmem>>, vector<1x96xf32>
    %22 = vector.extract_strided_slice %21 {offsets = [0, 0], sizes = [1, 32], strides = [1, 1]} : vector<1x96xf32> to vector<1x32xf32>
    %cst = arith.constant dense<0.000000e+00> : vector<16x96xf32>
    %23 = tpu.matmul %1, %3, %cst {dimension_numbers = #tpu.dot_dimension_numbers<[1], [1], [0], [0], [0, 0, 1, 0], [], []>} : vector<16x32xbf16>, vector<96x32xbf16>, vector<16x96xf32> -> vector<16x96xf32>
    %24 = vector.broadcast %7 : vector<1x96xf32> to vector<16x96xf32>
    %25 = arith.addf %23, %24 : vector<16x96xf32>
    %26 = vector.broadcast %8 : vector<1x96xf32> to vector<16x96xf32>
    %27 = arith.mulf %25, %26 : vector<16x96xf32>
    %28 = tpu.transpose %27, [1, 0] : vector<16x96xf32> -> vector<96x16xf32>
    %29 = vector.extract_strided_slice %28 {offsets = [0, 0], sizes = [32, 16], strides = [1, 1]} : vector<96x16xf32> to vector<32x16xf32>
    %30 = vector.shape_cast %29 : vector<32x16xf32> to vector<4x8x16xf32>
    %31 = vector.extract_strided_slice %28 {offsets = [32, 0], sizes = [32, 16], strides = [1, 1]} : vector<96x16xf32> to vector<32x16xf32>
    %32 = vector.shape_cast %31 : vector<32x16xf32> to vector<4x8x16xf32>
    %33 = vector.extract_strided_slice %28 {offsets = [64, 0], sizes = [32, 16], strides = [1, 1]} : vector<96x16xf32> to vector<32x16xf32>
    %34 = vector.shape_cast %33 : vector<32x16xf32> to vector<4x8x16xf32>
    %35 = tpu.transpose %30, [0, 2, 1] : vector<4x8x16xf32> -> vector<4x16x8xf32>
    "tpu.trace_start"() <{level = 10 : i32, message = "hqd,hdk->hqk"}> : () -> ()
    %cst_18 = arith.constant dense<0.000000e+00> : vector<4x16x16xf32>
    %36 = tpu.matmul %35, %32, %cst_18 {dimension_numbers = #tpu.dot_dimension_numbers<[2], [1], [1], [2], [0, 0, 0, 1, 1, 2], [0], [0]>} : vector<4x16x8xf32>, vector<4x8x16xf32>, vector<4x16x16xf32> -> vector<4x16x16xf32>
    "tpu.trace_stop"() : () -> ()
    %37 = vector.shape_cast %2 : vector<16x16xf32> to vector<1x16x16xf32>
    %38 = vector.broadcast %37 : vector<1x16x16xf32> to vector<4x16x16xf32>
    %39 = arith.addf %36, %38 : vector<4x16x16xf32>
    %cst_19 = arith.constant dense<0xFF800000> : vector<4x16xf32>
    %40 = vector.multi_reduction <maximumf>, %39, %cst_19 [2] : vector<4x16x16xf32> to vector<4x16xf32>
    %41 = vector.shape_cast %40 : vector<4x16xf32> to vector<4x16x1xf32>
    %42 = vector.broadcast %41 : vector<4x16x1xf32> to vector<4x16x16xf32>
    %43 = arith.subf %39, %42 : vector<4x16x16xf32>
    %44 = math.exp %43 : vector<4x16x16xf32>
    %cst_20 = arith.constant dense<0.000000e+00> : vector<4x16xf32>
    %45 = vector.multi_reduction <add>, %44, %cst_20 [2] : vector<4x16x16xf32> to vector<4x16xf32>
    %46 = vector.shape_cast %45 : vector<4x16xf32> to vector<4x16x1xf32>
    %47 = tpu.reciprocal %46 {approx = true} : vector<4x16x1xf32> -> vector<4x16x1xf32>
    %48 = vector.broadcast %47 : vector<4x16x1xf32> to vector<4x16x16xf32>
    %49 = arith.mulf %44, %48 : vector<4x16x16xf32>
    "tpu.trace_start"() <{level = 10 : i32, message = "hdk,hqk->hdq"}> : () -> ()
    %cst_21 = arith.constant dense<0.000000e+00> : vector<4x8x16xf32>
    %50 = tpu.matmul %34, %49, %cst_21 {dimension_numbers = #tpu.dot_dimension_numbers<[2], [2], [1], [1], [0, 0, 0, 1, 1, 1], [0], [0]>} : vector<4x8x16xf32>, vector<4x16x16xf32>, vector<4x8x16xf32> -> vector<4x8x16xf32>
    "tpu.trace_stop"() : () -> ()
    %51 = vector.shape_cast %50 : vector<4x8x16xf32> to vector<32x16xf32>
    %52 = tpu.transpose %51, [1, 0] : vector<32x16xf32> -> vector<16x32xf32>
    %53 = arith.truncf %52 : vector<16x32xf32> to vector<16x32xbf16>
    %cst_22 = arith.constant dense<0.000000e+00> : vector<16x32xf32>
    %54 = tpu.matmul %53, %4, %cst_22 {dimension_numbers = #tpu.dot_dimension_numbers<[1], [1], [0], [0], [0, 0, 1, 0], [], []>} : vector<16x32xbf16>, vector<32x32xbf16>, vector<16x32xf32> -> vector<16x32xf32>
    %55 = vector.broadcast %10 : vector<1x32xf32> to vector<16x32xf32>
    %56 = arith.addf %54, %55 : vector<16x32xf32>
    %57 = arith.addf %0, %56 : vector<16x32xf32>
    %cst_23 = arith.constant dense<0.000000e+00> : vector<16xf32>
    %58 = vector.multi_reduction <add>, %57, %cst_23 [1] : vector<16x32xf32> to vector<16xf32>
    %59 = vector.shape_cast %58 : vector<16xf32> to vector<16x1xf32>
    %cst_24 = arith.constant 3.200000e+01 : f32
    %60 = vector.broadcast %cst_24 : f32 to vector<16x1xf32>
    %61 = arith.divf %59, %60 : vector<16x1xf32>
    %62 = vector.broadcast %61 : vector<16x1xf32> to vector<16x32xf32>
    %63 = arith.subf %57, %62 : vector<16x32xf32>
    %64 = vector.broadcast %61 : vector<16x1xf32> to vector<16x32xf32>
    %65 = arith.subf %57, %64 : vector<16x32xf32>
    %66 = arith.mulf %63, %65 : vector<16x32xf32>
    %cst_25 = arith.constant dense<0.000000e+00> : vector<16xf32>
    %67 = vector.multi_reduction <add>, %66, %cst_25 [1] : vector<16x32xf32> to vector<16xf32>
    %68 = vector.shape_cast %67 : vector<16xf32> to vector<16x1xf32>
    %cst_26 = arith.constant 3.200000e+01 : f32
    %69 = vector.broadcast %cst_26 : f32 to vector<16x1xf32>
    %70 = arith.divf %68, %69 : vector<16x1xf32>
    %71 = vector.broadcast %61 : vector<16x1xf32> to vector<16x32xf32>
    %72 = arith.subf %57, %71 : vector<16x32xf32>
    %cst_27 = arith.constant 9.99999974E-6 : f32
    %73 = vector.broadcast %cst_27 : f32 to vector<16x1xf32>
    %74 = arith.addf %70, %73 : vector<16x1xf32>
    %75 = math.rsqrt %74 : vector<16x1xf32>
    %76 = vector.broadcast %75 : vector<16x1xf32> to vector<16x32xf32>
    %77 = arith.mulf %72, %76 : vector<16x32xf32>
    %78 = vector.broadcast %16 : vector<1x32xf32> to vector<16x32xf32>
    %79 = arith.mulf %77, %78 : vector<16x32xf32>
    %80 = vector.broadcast %18 : vector<1x32xf32> to vector<16x32xf32>
    %81 = arith.addf %79, %80 : vector<16x32xf32>
    %82 = arith.truncf %81 : vector<16x32xf32> to vector<16x32xbf16>
    %cst_28 = arith.constant dense<0.000000e+00> : vector<16x64xf32>
    %83 = tpu.matmul %82, %5, %cst_28 {dimension_numbers = #tpu.dot_dimension_numbers<[1], [1], [0], [0], [0, 0, 1, 0], [], []>} : vector<16x32xbf16>, vector<64x32xbf16>, vector<16x64xf32> -> vector<16x64xf32>
    %84 = vector.broadcast %12 : vector<1x64xf32> to vector<16x64xf32>
    %85 = arith.addf %83, %84 : vector<16x64xf32>
    %cst_29 = arith.constant 0.000000e+00 : f32
    %86 = vector.broadcast %cst_29 : f32 to vector<16x64xf32>
    %87 = arith.maximumf %85, %86 : vector<16x64xf32>
    %88 = arith.truncf %87 : vector<16x64xf32> to vector<16x64xbf16>
    %cst_30 = arith.constant dense<0.000000e+00> : vector<16x32xf32>
    %89 = tpu.matmul %88, %6, %cst_30 {dimension_numbers = #tpu.dot_dimension_numbers<[1], [0], [0], [1], [0, 0, 1, 1], [], []>} : vector<16x64xbf16>, vector<64x32xbf16>, vector<16x32xf32> -> vector<16x32xf32>
    %90 = vector.broadcast %14 : vector<1x32xf32> to vector<16x32xf32>
    %91 = arith.addf %89, %90 : vector<16x32xf32>
    %92 = arith.addf %81, %91 : vector<16x32xf32>
    %cst_31 = arith.constant dense<0.000000e+00> : vector<16xf32>
    %93 = vector.multi_reduction <add>, %92, %cst_31 [1] : vector<16x32xf32> to vector<16xf32>
    %94 = vector.shape_cast %93 : vector<16xf32> to vector<16x1xf32>
    %cst_32 = arith.constant 3.200000e+01 : f32
    %95 = vector.broadcast %cst_32 : f32 to vector<16x1xf32>
    %96 = arith.divf %94, %95 : vector<16x1xf32>
    %97 = vector.broadcast %96 : vector<16x1xf32> to vector<16x32xf32>
    %98 = arith.subf %92, %97 : vector<16x32xf32>
    %99 = vector.broadcast %96 : vector<16x1xf32> to vector<16x32xf32>
    %100 = arith.subf %92, %99 : vector<16x32xf32>
    %101 = arith.mulf %98, %100 : vector<16x32xf32>
    %cst_33 = arith.constant dense<0.000000e+00> : vector<16xf32>
    %102 = vector.multi_reduction <add>, %101, %cst_33 [1] : vector<16x32xf32> to vector<16xf32>
    %103 = vector.shape_cast %102 : vector<16xf32> to vector<16x1xf32>
    %cst_34 = arith.constant 3.200000e+01 : f32
    %104 = vector.broadcast %cst_34 : f32 to vector<16x1xf32>
    %105 = arith.divf %103, %104 : vector<16x1xf32>
    %106 = vector.broadcast %96 : vector<16x1xf32> to vector<16x32xf32>
    %107 = arith.subf %92, %106 : vector<16x32xf32>
    %cst_35 = arith.constant 9.99999974E-6 : f32
    %108 = vector.broadcast %cst_35 : f32 to vector<16x1xf32>
    %109 = arith.addf %105, %108 : vector<16x1xf32>
    %110 = math.rsqrt %109 : vector<16x1xf32>
    %111 = vector.broadcast %110 : vector<16x1xf32> to vector<16x32xf32>
    %112 = arith.mulf %107, %111 : vector<16x32xf32>
    %113 = vector.broadcast %20 : vector<1x32xf32> to vector<16x32xf32>
    %114 = arith.mulf %112, %113 : vector<16x32xf32>
    %115 = vector.broadcast %22 : vector<1x32xf32> to vector<16x32xf32>
    %116 = arith.addf %114, %115 : vector<16x32xf32>
    %c0_36 = arith.constant 0 : index
    %c0_37 = arith.constant 0 : index
    %117 = vector.load %arg4[%c0_36, %c0_37] : memref<16x32xf32, #tpu.memory_space<vmem>>, vector<16x32xf32>
    tpu.vector_store %arg4[%c0_36, %c0_37], %116 {strides = array<i32>} : memref<16x32xf32, #tpu.memory_space<vmem>>, vector<16x32xf32>,
    return
  }
}

</mosaic_0001>

<llo_original>
// kernel: tpu_custom_call.1
$region0: #{tpu_custom_call.1}
  #allocation0 [shape = 'u32[]', space=smem, size = 0x4, offset = 0x4, fixed_abs, tag = 'smem constant byte address 0x4 - core index']
  #allocation1 [shape = 'u32[72,128]{1,0:T(1,128)}', space=vmem, size = 0x9000, scoped, tag = 'internal scratch']
  %s0 = inlined_call_operand.vmem [shape: f32[16,32], index: 0, kind: input, shape index: {}]
  %s1 = inlined_call_operand.vmem [shape: f32[16,16], index: 1, kind: input, shape index: {}]
  %s2 = inlined_call_operand.vmem [shape: bf16[256,32], index: 2, kind: input, shape index: {}]
  %s3 = inlined_call_operand.vmem [shape: f32[9,96], index: 3, kind: input, shape index: {}]
  %s4 = inlined_call_operand.hbm [shape: f32[16,32], index: 4, kind: output, shape index: {}]
  %s5 = sld [smem:[#allocation0]]
  $region26: #{tpu_custom_call.1} parent=0
    _
  %s7 = ssub.s32 1, %s5
  %s8 = scalar_select 0, %s7, %s5
  $region1: #{tpu_custom_call.1} parent=0
    #allocation2 [shape = 'u8[8192]{0}', space=vmem, size = 0x2000, scoped, tag = 'output window, operand 0, single buffered']
    #allocation3 [shape = 's32[1]{0}', space=sflag, size = 0x4, scoped, tag = 'scoped memory for tpu_custom_call.1']
    %9 = vsyncpa [#allocation3], 0
    // Predicated region
    $region2: #{tpu_custom_call.1} parent=1 // pred_check
      _
    $region3: #{tpu_custom_call.1} parent=1 // pred_check_branch
      %11 = sbr.rel (0) target = $region5
    $region4: #{tpu_custom_call.1} parent=1 // pred_region
      _
    $region5: #{tpu_custom_call.1} parent=1 // pred_fallthru
      _
    // Predicated region
    $region6: #{tpu_custom_call.1} parent=1 // pred_check
      _
    $region7: #{tpu_custom_call.1} parent=1 // pred_check_branch
      %13 = sbr.rel (0) target = $region9
    $region8: #{tpu_custom_call.1} parent=1 // pred_region
      _
    $region9: #{tpu_custom_call.1} parent=1 // pred_fallthru
      _
    // Predicated region
    $region10: #{tpu_custom_call.1} parent=1 // pred_check
      _
    $region11: #{tpu_custom_call.1} parent=1 // pred_check_branch
      %15 = sbr.rel (0) target = $region13
    $region12: #{tpu_custom_call.1} parent=1 // pred_region
      _
    $region13: #{tpu_custom_call.1} parent=1 // pred_fallthru
      _
    // Predicated region
    $region14: #{tpu_custom_call.1} parent=1 // pred_check
      _
    $region15: #{tpu_custom_call.1} parent=1 // pred_check_branch
      %17 = sbr.rel (0) target = $region17
    $region16: #{tpu_custom_call.1} parent=1 // pred_region
      _
    $region17: #{tpu_custom_call.1} parent=1 // pred_fallthru
      _
    %v19 = vld [vmem:[%s0] sm:$0xff]
    %v20 = vld [vmem:[%s0 + $0x8] sm:$0xff]
    %v21 = vpack.c.bf16 %v20, %v19
    %v22 = vld [vmem:[%s1] sm:$0xff]
    %v23 = vld [vmem:[%s1 + $0x8] sm:$0xff]
    %v24 = vld [vmem:[%s2] sm:$0xf]
    %v25 = vld [vmem:[%s2 + $0x4] sm:$0xf]
    %v26 = vld [vmem:[%s2 + $0x8] sm:$0xf]
    %v27 = vld [vmem:[%s2 + $0xc] sm:$0xf]
    %v28 = vld [vmem:[%s2 + $0x10] sm:$0xf]
    %v29 = vld [vmem:[%s2 + $0x14] sm:$0xf]
    %v30 = vld [vmem:[%s2 + $0x18] sm:$0xf]
    %v31 = vld [vmem:[%s2 + $0x1c] sm:$0xf]
    %v32 = vld [vmem:[%s2 + $0x20] sm:$0xf]
    %v33 = vld [vmem:[%s2 + $0x24] sm:$0xf]
    %v34 = vld [vmem:[%s2 + $0x28] sm:$0xf]
    %v35 = vld [vmem:[%s2 + $0x2c] sm:$0xf]
    %v36 = vld [vmem:[%s2 + $0x30] sm:$0xf]
    %v37 = vld [vmem:[%s2 + $0x34] sm:$0xf]
    %v38 = vld [vmem:[%s2 + $0x38] sm:$0xf]
    %v39 = vld [vmem:[%s2 + $0x3c] sm:$0xf]
    %v40 = vld [vmem:[%s2 + $0x40] sm:$0xf]
    %v41 = vld [vmem:[%s2 + $0x44] sm:$0xf]
    %v42 = vld [vmem:[%s2 + $0x48] sm:$0xf]
    %v43 = vld [vmem:[%s2 + $0x4c] sm:$0xf]
    %v44 = vld [vmem:[%s2 + $0x50] sm:$0xf]
    %v45 = vld [vmem:[%s2 + $0x54] sm:$0xf]
    %v46 = vld [vmem:[%s2 + $0x58] sm:$0xf]
    %v47 = vld [vmem:[%s2 + $0x5c] sm:$0xf]
    %v48 = vld [vmem:[%s2 + $0x60] sm:$0xf]
    %v49 = vld [vmem:[%s2 + $0x64] sm:$0xf]
    %v50 = vld [vmem:[%s2 + $0x68] sm:$0xf]
    %v51 = vld [vmem:[%s2 + $0x6c] sm:$0xf]
    %v52 = vld [vmem:[%s2 + $0x70] sm:$0xf]
    %v53 = vld [vmem:[%s2 + $0x74] sm:$0xf]
    %v54 = vld [vmem:[%s2 + $0x78] sm:$0xf]
    %v55 = vld [vmem:[%s2 + $0x7c] sm:$0xf]
    %v56 = vld [vmem:[%s3] sm:$0x1]
    %v57 = vld [vmem:[%s3 + $0x1] sm:$0x1]
    %v58 = vld [vmem:[%s3 + $0x2] sm:$0x1]
    %v59 = vld [vmem:[%s3 + $0x3] sm:$0x1]
    %v60 = vld [vmem:[%s3 + $0x4] sm:$0x1]
    %v61 = vld [vmem:[%s3 + $0x5] sm:$0x1]
    %v62 = vld [vmem:[%s3 + $0x6] sm:$0x1]
    %v63 = vld [vmem:[%s3 + $0x7] sm:$0x1]
    %v64 = vld [vmem:[%s3 + $0x8] sm:$0x1]
    %v65 = vperm.slane %v56, 0
    %v78 = vunpack.c.l.b16 %v24
    %v79 = vunpack.c.l.b16 %v25
    %v80 = vunpack.c.l.b16 %v26
    %v81 = vunpack.c.l.b16 %v27
    %v82 = vunpack.c.l.b16 %v28
    %v83 = vunpack.c.l.b16 %v29
    %v84 = vunpack.c.l.b16 %v30
    %v85 = vunpack.c.l.b16 %v31
    %v86 = vunpack.c.l.b16 %v32
    %v87 = vunpack.c.l.b16 %v33
    %v88 = vunpack.c.l.b16 %v34
    %v89 = vunpack.c.l.b16 %v35
    %v90 = vpack.c.b16 %v79, %v78
    %v91 = vpack.c.b16 %v81, %v80
    %v92 = vpack.c.b16 %v83, %v82
    %v93 = vpack.c.b16 %v85, %v84
    %v94 = vpack.c.b16 %v87, %v86
    %v95 = vpack.c.b16 %v89, %v88
    %vm96 = vcmask 261120
    %v98 = vsel %vm96, %v21, 0
    %v101 = vsel %vm96, %v90, 0
    %v104 = vsel %vm96, %v91, 0
    %v107 = vsel %vm96, %v92, 0
    %v110 = vsel %vm96, %v93, 0
    %v113 = vsel %vm96, %v94, 0
    %v116 = vsel %vm96, %v95, 0
    %118 = vmatpush.bf16.xpose.msra.mxu0 0
    %119 = vmatpush.bf16.xpose.msra.mxu0 0
    %120 = vmatpush.bf16.xpose.msra.mxu0 %v116
    %121 = vmatpush.bf16.xpose.msra.mxu0 %v113
    %122 = vmatpush.bf16.xpose.msra.mxu0 %v110
    %123 = vmatpush.bf16.xpose.msra.mxu0 %v107
    %124 = vmatpush.bf16.xpose.msra.mxu0 %v104
    %125 = vmatpush.bf16.xpose.msra.mxu0 %v101
    %126 = vmatmul.bf16.gmra.mxu0 %v98
    %v127 = vpop.f32.mrf.mxu0
    %v128 = vadd.f32 %v65, %v127
    %v129 = vpop.f32.mrf.mxu0
    %v130 = vadd.f32 %v65, %v129
    %131 = vdwg.mxu0
    %v132 = vperm.slane %v57, 0
    %v133 = vmul.f32 %v128, %v132
    %v134 = vmul.f32 %v130, %v132
    %135 = vxpose.xlu0.b32.start [1/16] %v133, 128
    %136 = vxpose.xlu0.b32.cont [2/16] %v134, 128
    %137 = vxpose.xlu0.b32.cont [3/16] 0.0, 128
    %138 = vxpose.xlu0.b32.cont [4/16] 0.0, 128
    %139 = vxpose.xlu0.b32.cont [5/16] 0.0, 128
    %140 = vxpose.xlu0.b32.cont [6/16] 0.0, 128
    %141 = vxpose.xlu0.b32.cont [7/16] 0.0, 128
    %142 = vxpose.xlu0.b32.cont [8/16] 0.0, 128
    %143 = vxpose.xlu0.b32.cont [9/16] 0.0, 128
    %144 = vxpose.xlu0.b32.cont [10/16] 0.0, 128
    %145 = vxpose.xlu0.b32.cont [11/16] 0.0, 128
    %146 = vxpose.xlu0.b32.cont [12/16] 0.0, 128
    %147 = vxpose.xlu0.b32.cont [13/16] 0.0, 128
    %148 = vxpose.xlu0.b32.cont [14/16] 0.0, 128
    %149 = vxpose.xlu0.b32.cont [15/16] 0.0, 128
    %150 = vxpose.xlu0.b32.end [16/16] 0.0, 128
    %v151 = vpop.trf.xlu0
    %v152 = vpop.trf.xlu0
    %v153 = vpop.trf.xlu0
    %v154 = vpop.trf.xlu0
    %v155 = vpop.trf.xlu0
    %v156 = vpop.trf.xlu0
    %v157 = vpop.trf.xlu0
    %v158 = vpop.trf.xlu0
    %v159 = vpop.trf.xlu0
    %v160 = vpop.trf.xlu0
    %v161 = vpop.trf.xlu0
    %v162 = vpop.trf.xlu0
    %v163 = vpop.trf.xlu0
    %v164 = vpop.trf.xlu0
    %v165 = vpop.trf.xlu0
    %v166 = vpop.trf.xlu0
    %167 = vxpose.xlu0.b32.start [1/16] %v151, 128
    %168 = vxpose.xlu0.b32.cont [2/16] 0.0, 128
    %169 = vxpose.xlu0.b32.cont [3/16] 0.0, 128
    %170 = vxpose.xlu0.b32.cont [4/16] 0.0, 128
    %171 = vxpose.xlu0.b32.cont [5/16] 0.0, 128
    %172 = vxpose.xlu0.b32.cont [6/16] 0.0, 128
    %173 = vxpose.xlu0.b32.cont [7/16] 0.0, 128
    %174 = vxpose.xlu0.b32.cont [8/16] 0.0, 128
    %175 = vxpose.xlu0.b32.cont [9/16] 0.0, 128
    %176 = vxpose.xlu0.b32.cont [10/16] 0.0, 128
    %177 = vxpose.xlu0.b32.cont [11/16] 0.0, 128
    %178 = vxpose.xlu0.b32.cont [12/16] 0.0, 128
    %179 = vxpose.xlu0.b32.cont [13/16] 0.0, 128
    %180 = vxpose.xlu0.b32.cont [14/16] 0.0, 128
    %181 = vxpose.xlu0.b32.cont [15/16] 0.0, 128
    %182 = vxpose.xlu0.b32.end [16/16] 0.0, 128
    %v183 = vpop.trf.xlu0
    %v184 = vpop.trf.xlu0
    %v185 = vpop.trf.xlu0
    %v186 = vpop.trf.xlu0
    %v187 = vpop.trf.xlu0
    %v188 = vpop.trf.xlu0
    %v189 = vpop.trf.xlu0
    %v190 = vpop.trf.xlu0
    %v191 = vpop.trf.xlu0
    %v192 = vpop.trf.xlu0
    %v193 = vpop.trf.xlu0
    %v194 = vpop.trf.xlu0
    %v195 = vpop.trf.xlu0
    %v196 = vpop.trf.xlu0
    %v197 = vpop.trf.xlu0
    %v198 = vpop.trf.xlu0
    %199 = vxpose.xlu0.b32.start [1/16] %v152, 128
    %200 = vxpose.xlu0.b32.cont [2/16] 0.0, 128
    %201 = vxpose.xlu0.b32.cont [3/16] 0.0, 128
    %202 = vxpose.xlu0.b32.cont [4/16] 0.0, 128
    %203 = vxpose.xlu0.b32.cont [5/16] 0.0, 128
    %204 = vxpose.xlu0.b32.cont [6/16] 0.0, 128
    %205 = vxpose.xlu0.b32.cont [7/16] 0.0, 128
    %206 = vxpose.xlu0.b32.cont [8/16] 0.0, 128
    %207 = vxpose.xlu0.b32.cont [9/16] 0.0, 128
    %208 = vxpose.xlu0.b32.cont [10/16] 0.0, 128
    %209 = vxpose.xlu0.b32.cont [11/16] 0.0, 128
    %210 = vxpose.xlu0.b32.cont [12/16] 0.0, 128
    %211 = vxpose.xlu0.b32.cont [13/16] 0.0, 128
    %212 = vxpose.xlu0.b32.cont [14/16] 0.0, 128
    %213 = vxpose.xlu0.b32.cont [15/16] 0.0, 128
    %214 = vxpose.xlu0.b32.end [16/16] 0.0, 128
    %v215 = vpop.trf.xlu0
    %v216 = vpop.trf.xlu0
    %v217 = vpop.trf.xlu0
    %v218 = vpop.trf.xlu0
    %v219 = vpop.trf.xlu0
    %v220 = vpop.trf.xlu0
    %v221 = vpop.trf.xlu0
    %v222 = vpop.trf.xlu0
    %v223 = vpop.trf.xlu0
    %v224 = vpop.trf.xlu0
    %v225 = vpop.trf.xlu0
    %v226 = vpop.trf.xlu0
    %v227 = vpop.trf.xlu0
    %v228 = vpop.trf.xlu0
    %v229 = vpop.trf.xlu0
    %v230 = vpop.trf.xlu0
    %231 = vxpose.xlu0.b32.start [1/16] %v153, 128
    %232 = vxpose.xlu0.b32.cont [2/16] 0.0, 128
    %233 = vxpose.xlu0.b32.cont [3/16] 0.0, 128
    %234 = vxpose.xlu0.b32.cont [4/16] 0.0, 128
    %235 = vxpose.xlu0.b32.cont [5/16] 0.0, 128
    %236 = vxpose.xlu0.b32.cont [6/16] 0.0, 128
    %237 = vxpose.xlu0.b32.cont [7/16] 0.0, 128
    %238 = vxpose.xlu0.b32.cont [8/16] 0.0, 128
    %239 = vxpose.xlu0.b32.cont [9/16] 0.0, 128
    %240 = vxpose.xlu0.b32.cont [10/16] 0.0, 128
    %241 = vxpose.xlu0.b32.cont [11/16] 0.0, 128
    %242 = vxpose.xlu0.b32.cont [12/16] 0.0, 128
    %243 = vxpose.xlu0.b32.cont [13/16] 0.0, 128
    %244 = vxpose.xlu0.b32.cont [14/16] 0.0, 128
    %245 = vxpose.xlu0.b32.cont [15/16] 0.0, 128
    %246 = vxpose.xlu0.b32.end [16/16] 0.0, 128
    %v247 = vpop.trf.xlu0
    %v248 = vpop.trf.xlu0
    %v249 = vpop.trf.xlu0
    %v250 = vpop.trf.xlu0
    %v251 = vpop.trf.xlu0
    %v252 = vpop.trf.xlu0
    %v253 = vpop.trf.xlu0
    %v254 = vpop.trf.xlu0
    %v255 = vpop.trf.xlu0
    %v256 = vpop.trf.xlu0
    %v257 = vpop.trf.xlu0
    %v258 = vpop.trf.xlu0
    %v259 = vpop.trf.xlu0
    %v260 = vpop.trf.xlu0
    %v261 = vpop.trf.xlu0
    %v262 = vpop.trf.xlu0
    %263 = vxpose.xlu0.b32.start [1/16] %v154, 128
    %264 = vxpose.xlu0.b32.cont [2/16] 0.0, 128
    %265 = vxpose.xlu0.b32.cont [3/16] 0.0, 128
    %266 = vxpose.xlu0.b32.cont [4/16] 0.0, 128
    %267 = vxpose.xlu0.b32.cont [5/16] 0.0, 128
    %268 = vxpose.xlu0.b32.cont [6/16] 0.0, 128
    %269 = vxpose.xlu0.b32.cont [7/16] 0.0, 128
    %270 = vxpose.xlu0.b32.cont [8/16] 0.0, 128
    %271 = vxpose.xlu0.b32.cont [9/16] 0.0, 128
    %272 = vxpose.xlu0.b32.cont [10/16] 0.0, 128
    %273 = vxpose.xlu0.b32.cont [11/16] 0.0, 128
    %274 = vxpose.xlu0.b32.cont [12/16] 0.0, 128
    %275 = vxpose.xlu0.b32.cont [13/16] 0.0, 128
    %276 = vxpose.xlu0.b32.cont [14/16] 0.0, 128
    %277 = vxpose.xlu0.b32.cont [15/16] 0.0, 128
    %278 = vxpose.xlu0.b32.end [16/16] 0.0, 128
    %v279 = vpop.trf.xlu0
    %v280 = vpop.trf.xlu0
    %v281 = vpop.trf.xlu0
    %v282 = vpop.trf.xlu0
    %v283 = vpop.trf.xlu0
    %v284 = vpop.trf.xlu0
    %v285 = vpop.trf.xlu0
    %v286 = vpop.trf.xlu0
    %v287 = vpop.trf.xlu0
    %v288 = vpop.trf.xlu0
    %v289 = vpop.trf.xlu0
    %v290 = vpop.trf.xlu0
    %v291 = vpop.trf.xlu0
    %v292 = vpop.trf.xlu0
    %v293 = vpop.trf.xlu0
    %v294 = vpop.trf.xlu0
    %vm295 = vcmask 64512
    %v297 = vsel %vm295, %v183, 0
    %v300 = vsel %vm295, %v184, 0
    %302 = vmatpush.msra.mxu0 0.0
    %303 = vmatpush.msra.mxu0 0.0
    %304 = vmatpush.msra.mxu0 0.0
    %305 = vmatpush.msra.mxu0 0.0
    %306 = vmatpush.msra.mxu0 0.0
    %307 = vmatpush.msra.mxu0 0.0
    %308 = vmatpush.msra.mxu0 0.0
    %309 = vmatpush.msra.mxu0 0.0
    %310 = vmatpush.msra.mxu0 0.0
    %311 = vmatpush.msra.mxu0 0.0
    %312 = vmatpush.msra.mxu0 0.0
    %313 = vmatpush.msra.mxu0 0.0
    %314 = vmatpush.msra.mxu0 0.0
    %315 = vmatpush.msra.mxu0 0.0
    %316 = vmatpush.msra.mxu0 0.0
    %317 = vmatpush.msra.mxu0 %v155
    %318 = vmatmul.f32.gmra.mxu0 %v297
    %v319 = vpop.f32.mrf.mxu0
    %v320 = vadd.f32 %v22, %v319
    %321 = vmatmul.f32.gmra.mxu0 %v300
    %v322 = vpop.f32.mrf.mxu0
    %v323 = vadd.f32 %v23, %v322
    %324 = vdwg.mxu0
    %v326 = vsel %vm295, %v215, 0
    %v329 = vsel %vm295, %v216, 0
    %331 = vmatpush.msra.mxu0 0.0
    %332 = vmatpush.msra.mxu0 0.0
    %333 = vmatpush.msra.mxu0 0.0
    %334 = vmatpush.msra.mxu0 0.0
    %335 = vmatpush.msra.mxu0 0.0
    %336 = vmatpush.msra.mxu0 0.0
    %337 = vmatpush.msra.mxu0 0.0
    %338 = vmatpush.msra.mxu0 0.0
    %339 = vmatpush.msra.mxu0 0.0
    %340 = vmatpush.msra.mxu0 0.0
    %341 = vmatpush.msra.mxu0 0.0
    %342 = vmatpush.msra.mxu0 0.0
    %343 = vmatpush.msra.mxu0 0.0
    %344 = vmatpush.msra.mxu0 0.0
    %345 = vmatpush.msra.mxu0 0.0
    %346 = vmatpush.msra.mxu0 %v156
    %347 = vmatmul.f32.gmra.mxu0 %v326
    %v348 = vpop.f32.mrf.mxu0
    %v349 = vadd.f32 %v22, %v348
    %350 = vmatmul.f32.gmra.mxu0 %v329
    %v351 = vpop.f32.mrf.mxu0
    %v352 = vadd.f32 %v23, %v351
    %353 = vdwg.mxu0
    %v355 = vsel %vm295, %v247, 0
    %v358 = vsel %vm295, %v248, 0
    %360 = vmatpush.msra.mxu0 0.0
    %361 = vmatpush.msra.mxu0 0.0
    %362 = vmatpush.msra.mxu0 0.0
    %363 = vmatpush.msra.mxu0 0.0
    %364 = vmatpush.msra.mxu0 0.0
    %365 = vmatpush.msra.mxu0 0.0
    %366 = vmatpush.msra.mxu0 0.0
    %367 = vmatpush.msra.mxu0 0.0
    %368 = vmatpush.msra.mxu0 0.0
    %369 = vmatpush.msra.mxu0 0.0
    %370 = vmatpush.msra.mxu0 0.0
    %371 = vmatpush.msra.mxu0 0.0
    %372 = vmatpush.msra.mxu0 0.0
    %373 = vmatpush.msra.mxu0 0.0
    %374 = vmatpush.msra.mxu0 0.0
    %375 = vmatpush.msra.mxu0 %v157
    %376 = vmatmul.f32.gmra.mxu0 %v355
    %v377 = vpop.f32.mrf.mxu0
    %v378 = vadd.f32 %v22, %v377
    %379 = vmatmul.f32.gmra.mxu0 %v358
    %v380 = vpop.f32.mrf.mxu0
    %v381 = vadd.f32 %v23, %v380
    %382 = vdwg.mxu0
    %v384 = vsel %vm295, %v279, 0
    %v387 = vsel %vm295, %v280, 0
    %389 = vmatpush.msra.mxu0 0.0
    %390 = vmatpush.msra.mxu0 0.0
    %391 = vmatpush.msra.mxu0 0.0
    %392 = vmatpush.msra.mxu0 0.0
    %393 = vmatpush.msra.mxu0 0.0
    %394 = vmatpush.msra.mxu0 0.0
    %395 = vmatpush.msra.mxu0 0.0
    %396 = vmatpush.msra.mxu0 0.0
    %397 = vmatpush.msra.mxu0 0.0
    %398 = vmatpush.msra.mxu0 0.0
    %399 = vmatpush.msra.mxu0 0.0
    %400 = vmatpush.msra.mxu0 0.0
    %401 = vmatpush.msra.mxu0 0.0
    %402 = vmatpush.msra.mxu0 0.0
    %403 = vmatpush.msra.mxu0 0.0
    %404 = vmatpush.msra.mxu0 %v158
    %405 = vmatmul.f32.gmra.mxu0 %v384
    %v406 = vpop.f32.mrf.mxu0
    %v407 = vadd.f32 %v22, %v406
    %408 = vmatmul.f32.gmra.mxu0 %v387
    %v409 = vpop.f32.mrf.mxu0
    %v410 = vadd.f32 %v23, %v409
    %411 = vdwg.mxu0
    %vm412 = vcmask 130048
    %v413 = vsel %vm412, %v320, -inf
    %414 = vmax.xlane.f32.xlu0 %v413
    %v415 = vpop.xlane.xlu0 %414
    %v416 = vsel %vm412, %v323, -inf
    %417 = vmax.xlane.f32.xlu0 %v416
    %v418 = vpop.xlane.xlu0 %417
    %v419 = vsel %vm412, %v349, -inf
    %420 = vmax.xlane.f32.xlu0 %v419
    %v421 = vpop.xlane.xlu0 %420
    %v422 = vsel %vm412, %v352, -inf
    %423 = vmax.xlane.f32.xlu0 %v422
    %v424 = vpop.xlane.xlu0 %423
    %v425 = vsel %vm412, %v378, -inf
    %426 = vmax.xlane.f32.xlu0 %v425
    %v427 = vpop.xlane.xlu0 %426
    %v428 = vsel %vm412, %v381, -inf
    %429 = vmax.xlane.f32.xlu0 %v428
    %v430 = vpop.xlane.xlu0 %429
    %v431 = vsel %vm412, %v407, -inf
    %432 = vmax.xlane.f32.xlu0 %v431
    %v433 = vpop.xlane.xlu0 %432
    %v434 = vsel %vm412, %v410, -inf
    %435 = vmax.xlane.f32.xlu0 %v434
    %v436 = vpop.xlane.xlu0 %435
    %v437 = vsub.f32 %v320, %v415
    %v438 = vsub.f32 %v323, %v418
    %v439 = vsub.f32 %v349, %v421
    %v440 = vsub.f32 %v352, %v424
    %v441 = vsub.f32 %v378, %v427
    %v442 = vsub.f32 %v381, %v430
    %v443 = vsub.f32 %v407, %v433
    %v444 = vsub.f32 %v410, %v436
    %v445 = vmul.f32 %v437, 1.442695
    %v446 = vpow.pop %v445
    %v447 = vmul.f32 %v438, 1.442695
    %v448 = vpow.pop %v447
    %v449 = vmul.f32 %v439, 1.442695
    %v450 = vpow.pop %v449
    %v451 = vmul.f32 %v440, 1.442695
    %v452 = vpow.pop %v451
    %v453 = vmul.f32 %v441, 1.442695
    %v454 = vpow.pop %v453
    %v455 = vmul.f32 %v442, 1.442695
    %v456 = vpow.pop %v455
    %v457 = vmul.f32 %v443, 1.442695
    %v458 = vpow.pop %v457
    %v459 = vmul.f32 %v444, 1.442695
    %v460 = vpow.pop %v459
    %v461 = vsel %vm412, %v446, 0.0
    %462 = vadd.xlane.f32.xlu0 %v461
    %v463 = vpop.xlane.xlu0 %462
    %v464 = vsel %vm412, %v448, 0.0
    %465 = vadd.xlane.f32.xlu0 %v464
    %v466 = vpop.xlane.xlu0 %465
    %v467 = vsel %vm412, %v450, 0.0
    %468 = vadd.xlane.f32.xlu0 %v467
    %v469 = vpop.xlane.xlu0 %468
    %v470 = vsel %vm412, %v452, 0.0
    %471 = vadd.xlane.f32.xlu0 %v470
    %v472 = vpop.xlane.xlu0 %471
    %v473 = vsel %vm412, %v454, 0.0
    %474 = vadd.xlane.f32.xlu0 %v473
    %v475 = vpop.xlane.xlu0 %474
    %v476 = vsel %vm412, %v456, 0.0
    %477 = vadd.xlane.f32.xlu0 %v476
    %v478 = vpop.xlane.xlu0 %477
    %v479 = vsel %vm412, %v458, 0.0
    %480 = vadd.xlane.f32.xlu0 %v479
    %v481 = vpop.xlane.xlu0 %480
    %v482 = vsel %vm412, %v460, 0.0
    %483 = vadd.xlane.f32.xlu0 %v482
    %v484 = vpop.xlane.xlu0 %483
    %v485 = vrcp.pop %v463
    %v486 = vrcp.pop %v466
    %v487 = vrcp.pop %v469
    %v488 = vrcp.pop %v472
    %v489 = vrcp.pop %v475
    %v490 = vrcp.pop %v478
    %v491 = vrcp.pop %v481
    %v492 = vrcp.pop %v484
    %v493 = vmul.f32 %v446, %v485
    %v494 = vmul.f32 %v448, %v486
    %v495 = vmul.f32 %v450, %v487
    %v496 = vmul.f32 %v452, %v488
    %v497 = vmul.f32 %v454, %v489
    %v498 = vmul.f32 %v456, %v490
    %v499 = vmul.f32 %v458, %v491
    %v500 = vmul.f32 %v460, %v492
    %v502 = vsel %vm412, %v159, 0
    %v505 = vsel %vm412, %v493, 0
    %v508 = vsel %vm412, %v494, 0
    %510 = vmatpush.xpose.msra.mxu0 0.0
    %511 = vmatpush.xpose.msra.mxu0 0.0
    %512 = vmatpush.xpose.msra.mxu0 0.0
    %513 = vmatpush.xpose.msra.mxu0 0.0
    %514 = vmatpush.xpose.msra.mxu0 0.0
    %515 = vmatpush.xpose.msra.mxu0 0.0
    %516 = vmatpush.xpose.msra.mxu0 0.0
    %517 = vmatpush.xpose.msra.mxu0 0.0
    %518 = vmatpush.xpose.msra.mxu0 0.0
    %519 = vmatpush.xpose.msra.mxu0 0.0
    %520 = vmatpush.xpose.msra.mxu0 0.0
    %521 = vmatpush.xpose.msra.mxu0 0.0
    %522 = vmatpush.xpose.msra.mxu0 0.0
    %523 = vmatpush.xpose.msra.mxu0 0.0
    %524 = vmatpush.xpose.msra.mxu0 %v508
    %525 = vmatpush.xpose.msra.mxu0 %v505
    %526 = vmatmul.f32.gmra.mxu0 %v502
    %v527 = vpop.f32.mrf.mxu0
    %v528 = vadd.f32 0.0, %v527
    %529 = vdwg.mxu0
    %v531 = vsel %vm412, %v160, 0
    %v534 = vsel %vm412, %v495, 0
    %v537 = vsel %vm412, %v496, 0
    %539 = vmatpush.xpose.msra.mxu0 0.0
    %540 = vmatpush.xpose.msra.mxu0 0.0
    %541 = vmatpush.xpose.msra.mxu0 0.0
    %542 = vmatpush.xpose.msra.mxu0 0.0
    %543 = vmatpush.xpose.msra.mxu0 0.0
    %544 = vmatpush.xpose.msra.mxu0 0.0
    %545 = vmatpush.xpose.msra.mxu0 0.0
    %546 = vmatpush.xpose.msra.mxu0 0.0
    %547 = vmatpush.xpose.msra.mxu0 0.0
    %548 = vmatpush.xpose.msra.mxu0 0.0
    %549 = vmatpush.xpose.msra.mxu0 0.0
    %550 = vmatpush.xpose.msra.mxu0 0.0
    %551 = vmatpush.xpose.msra.mxu0 0.0
    %552 = vmatpush.xpose.msra.mxu0 0.0
    %553 = vmatpush.xpose.msra.mxu0 %v537
    %554 = vmatpush.xpose.msra.mxu0 %v534
    %555 = vmatmul.f32.gmra.mxu0 %v531
    %v556 = vpop.f32.mrf.mxu0
    %v557 = vadd.f32 0.0, %v556
    %558 = vdwg.mxu0
    %v560 = vsel %vm412, %v161, 0
    %v563 = vsel %vm412, %v497, 0
    %v566 = vsel %vm412, %v498, 0
    %568 = vmatpush.xpose.msra.mxu0 0.0
    %569 = vmatpush.xpose.msra.mxu0 0.0
    %570 = vmatpush.xpose.msra.mxu0 0.0
    %571 = vmatpush.xpose.msra.mxu0 0.0
    %572 = vmatpush.xpose.msra.mxu0 0.0
    %573 = vmatpush.xpose.msra.mxu0 0.0
    %574 = vmatpush.xpose.msra.mxu0 0.0
    %575 = vmatpush.xpose.msra.mxu0 0.0
    %576 = vmatpush.xpose.msra.mxu0 0.0
    %577 = vmatpush.xpose.msra.mxu0 0.0
    %578 = vmatpush.xpose.msra.mxu0 0.0
    %579 = vmatpush.xpose.msra.mxu0 0.0
    %580 = vmatpush.xpose.msra.mxu0 0.0
    %581 = vmatpush.xpose.msra.mxu0 0.0
    %582 = vmatpush.xpose.msra.mxu0 %v566
    %583 = vmatpush.xpose.msra.mxu0 %v563
    %584 = vmatmul.f32.gmra.mxu0 %v560
    %v585 = vpop.f32.mrf.mxu0
    %v586 = vadd.f32 0.0, %v585
    %587 = vdwg.mxu0
    %v589 = vsel %vm412, %v162, 0
    %v592 = vsel %vm412, %v499, 0
    %v595 = vsel %vm412, %v500, 0
    %597 = vmatpush.xpose.msra.mxu0 0.0
    %598 = vmatpush.xpose.msra.mxu0 0.0
    %599 = vmatpush.xpose.msra.mxu0 0.0
    %600 = vmatpush.xpose.msra.mxu0 0.0
    %601 = vmatpush.xpose.msra.mxu0 0.0
    %602 = vmatpush.xpose.msra.mxu0 0.0
    %603 = vmatpush.xpose.msra.mxu0 0.0
    %604 = vmatpush.xpose.msra.mxu0 0.0
    %605 = vmatpush.xpose.msra.mxu0 0.0
    %606 = vmatpush.xpose.msra.mxu0 0.0
    %607 = vmatpush.xpose.msra.mxu0 0.0
    %608 = vmatpush.xpose.msra.mxu0 0.0
    %609 = vmatpush.xpose.msra.mxu0 0.0
    %610 = vmatpush.xpose.msra.mxu0 0.0
    %611 = vmatpush.xpose.msra.mxu0 %v595
    %612 = vmatpush.xpose.msra.mxu0 %v592
    %613 = vmatmul.f32.gmra.mxu0 %v589
    %v614 = vpop.f32.mrf.mxu0
    %v615 = vadd.f32 0.0, %v614
    %616 = vdwg.mxu0
    %617 = vxpose.xlu0.b32.start [1/16] %v528, 128
    %618 = vxpose.xlu0.b32.cont [2/16] %v557, 128
    %619 = vxpose.xlu0.b32.cont [3/16] %v586, 128
    %620 = vxpose.xlu0.b32.cont [4/16] %v615, 128
    %621 = vxpose.xlu0.b32.cont [5/16] 0.0, 128
    %622 = vxpose.xlu0.b32.cont [6/16] 0.0, 128
    %623 = vxpose.xlu0.b32.cont [7/16] 0.0, 128
    %624 = vxpose.xlu0.b32.cont [8/16] 0.0, 128
    %625 = vxpose.xlu0.b32.cont [9/16] 0.0, 128
    %626 = vxpose.xlu0.b32.cont [10/16] 0.0, 128
    %627 = vxpose.xlu0.b32.cont [11/16] 0.0, 128
    %628 = vxpose.xlu0.b32.cont [12/16] 0.0, 128
    %629 = vxpose.xlu0.b32.cont [13/16] 0.0, 128
    %630 = vxpose.xlu0.b32.cont [14/16] 0.0, 128
    %631 = vxpose.xlu0.b32.cont [15/16] 0.0, 128
    %632 = vxpose.xlu0.b32.end [16/16] 0.0, 128
    %v633 = vpop.trf.xlu0
    %v634 = vpop.trf.xlu0
    %v635 = vpop.trf.xlu0
    %v636 = vpop.trf.xlu0
    %v637 = vpop.trf.xlu0
    %v638 = vpop.trf.xlu0
    %v639 = vpop.trf.xlu0
    %v640 = vpop.trf.xlu0
    %v641 = vpop.trf.xlu0
    %v642 = vpop.trf.xlu0
    %v643 = vpop.trf.xlu0
    %v644 = vpop.trf.xlu0
    %v645 = vpop.trf.xlu0
    %v646 = vpop.trf.xlu0
    %v647 = vpop.trf.xlu0
    %v648 = vpop.trf.xlu0
    %v649 = vpack.c.bf16 %v634, %v633
    %v650 = vperm.slane %v58, 0
    %v655 = vunpack.c.l.b16 %v36
    %v656 = vunpack.c.l.b16 %v37
    %v657 = vunpack.c.l.b16 %v38
    %v658 = vunpack.c.l.b16 %v39
    %v659 = vpack.c.b16 %v656, %v655
    %v660 = vpack.c.b16 %v658, %v657
    %v662 = vsel %vm96, %v649, 0
    %v665 = vsel %vm96, %v659, 0
    %v668 = vsel %vm96, %v660, 0
    %670 = vmatpush.bf16.xpose.msra.mxu0 0
    %671 = vmatpush.bf16.xpose.msra.mxu0 0
    %672 = vmatpush.bf16.xpose.msra.mxu0 0
    %673 = vmatpush.bf16.xpose.msra.mxu0 0
    %674 = vmatpush.bf16.xpose.msra.mxu0 0
    %675 = vmatpush.bf16.xpose.msra.mxu0 0
    %676 = vmatpush.bf16.xpose.msra.mxu0 %v668
    %677 = vmatpush.bf16.xpose.msra.mxu0 %v665
    %678 = vmatmul.bf16.gmra.mxu0 %v662
    %v679 = vpop.f32.mrf.mxu0
    %v680 = vadd.f32 %v650, %v679
    %v681 = vpop.f32.mrf.mxu0
    %v682 = vadd.f32 %v650, %v681
    %683 = vdwg.mxu0
    %v684 = vadd.f32 %v19, %v680
    %v685 = vadd.f32 %v20, %v682
    %v686 = vsel %vm96, %v684, 0.0
    %687 = vadd.xlane.f32.xlu0 %v686
    %v688 = vpop.xlane.xlu0 %687
    %v689 = vsel %vm96, %v685, 0.0
    %690 = vadd.xlane.f32.xlu0 %v689
    %v691 = vpop.xlane.xlu0 %690
    %v692 = vrcp.pop 32.0
    %v693 = vmul.f32 32.0, %v692
    %v694 = vsub.f32 1.0, %v693
    %v695 = vmul.f32 %v692, %v694
    %v696 = vadd.f32 %v692, %v695
    %vm697 = vweird.f32 %v692
    %v698 = vsel %vm697, %v692, %v696
    %v699 = vmul.f32 %v688, %v698
    %v700 = vmul.f32 %v691, %v698
    %v701 = vsub.f32 %v684, %v699
    %v702 = vsub.f32 %v685, %v700
    %v703 = vmul.f32 %v701, %v701
    %v704 = vmul.f32 %v702, %v702
    %v705 = vsel %vm96, %v703, 0.0
    %706 = vadd.xlane.f32.xlu0 %v705
    %v707 = vpop.xlane.xlu0 %706
    %v708 = vsel %vm96, %v704, 0.0
    %709 = vadd.xlane.f32.xlu0 %v708
    %v710 = vpop.xlane.xlu0 %709
    %v711 = vmul.f32 %v707, %v698
    %v712 = vmul.f32 %v710, %v698
    %v713 = vadd.f32 %v711, 1e-05
    %v714 = vadd.f32 %v712, 1e-05
    %v715 = vrsqrt.pop %v713
    %v716 = vmul.f32 %v715, %v713
    %v717 = vmul.f32 %v716, %v715
    %v718 = vmul.f32 0.5, %v717
    %v719 = vsub.f32 1.5, %v718
    %v720 = vmul.f32 %v715, %v719
    %vm721 = vweird.f32 %v713
    %vm722 = vweird.f32 %v715
    %vm723 = vmor %vm721, %vm722
    %v724 = vsel %vm723, %v715, %v720
    %v725 = vrsqrt.pop %v714
    %v726 = vmul.f32 %v725, %v714
    %v727 = vmul.f32 %v726, %v725
    %v728 = vmul.f32 0.5, %v727
    %v729 = vsub.f32 1.5, %v728
    %v730 = vmul.f32 %v725, %v729
    %vm731 = vweird.f32 %v714
    %vm732 = vweird.f32 %v725
    %vm733 = vmor %vm731, %vm732
    %v734 = vsel %vm733, %v725, %v730
    %v735 = vmul.f32 %v701, %v724
    %v736 = vmul.f32 %v702, %v734
    %v737 = vperm.slane %v61, 0
    %v738 = vmul.f32 %v735, %v737
    %v739 = vmul.f32 %v736, %v737
    %v740 = vperm.slane %v62, 0
    %v741 = vadd.f32 %v738, %v740
    %v742 = vadd.f32 %v739, %v740
    %v743 = vpack.c.bf16 %v742, %v741
    %v744 = vperm.slane %v59, 0
    %v753 = vunpack.c.l.b16 %v40
    %v754 = vunpack.c.l.b16 %v41
    %v755 = vunpack.c.l.b16 %v42
    %v756 = vunpack.c.l.b16 %v43
    %v757 = vunpack.c.l.b16 %v44
    %v758 = vunpack.c.l.b16 %v45
    %v759 = vunpack.c.l.b16 %v46
    %v760 = vunpack.c.l.b16 %v47
    %v761 = vpack.c.b16 %v754, %v753
    %v762 = vpack.c.b16 %v756, %v755
    %v763 = vpack.c.b16 %v758, %v757
    %v764 = vpack.c.b16 %v760, %v759
    %v766 = vsel %vm96, %v743, 0
    %v769 = vsel %vm96, %v761, 0
    %v772 = vsel %vm96, %v762, 0
    %v775 = vsel %vm96, %v763, 0
    %v778 = vsel %vm96, %v764, 0
    %780 = vmatpush.bf16.xpose.msra.mxu0 0
    %781 = vmatpush.bf16.xpose.msra.mxu0 0
    %782 = vmatpush.bf16.xpose.msra.mxu0 0
    %783 = vmatpush.bf16.xpose.msra.mxu0 0
    %784 = vmatpush.bf16.xpose.msra.mxu0 %v778
    %785 = vmatpush.bf16.xpose.msra.mxu0 %v775
    %786 = vmatpush.bf16.xpose.msra.mxu0 %v772
    %787 = vmatpush.bf16.xpose.msra.mxu0 %v769
    %788 = vmatmul.bf16.gmra.mxu0 %v766
    %v789 = vpop.f32.mrf.mxu0
    %v790 = vadd.f32 %v744, %v789
    %v791 = vpop.f32.mrf.mxu0
    %v792 = vadd.f32 %v744, %v791
    %793 = vdwg.mxu0
    %v794 = vmax.f32 %v790, 0.0
    %v795 = vmax.f32 %v792, 0.0
    %v796 = vpack.c.bf16 %v795, %v794
    %v797 = vperm.slane %v60, 0
    %v806 = vunpack.c.l.b16 %v48
    %v807 = vunpack.c.l.b16 %v49
    %v808 = vunpack.c.l.b16 %v50
    %v809 = vunpack.c.l.b16 %v51
    %v810 = vunpack.c.l.b16 %v52
    %v811 = vunpack.c.l.b16 %v53
    %v812 = vunpack.c.l.b16 %v54
    %v813 = vunpack.c.l.b16 %v55
    %v814 = vpack.c.b16 %v807, %v806
    %v815 = vpack.c.b16 %v809, %v808
    %v816 = vpack.c.b16 %v811, %v810
    %v817 = vpack.c.b16 %v813, %v812
    %vm822 = vcmask 523264
    %v824 = vsel %vm822, %v796, 0
    %826 = vmatpush.bf16.msra.mxu0 0
    %827 = vmatpush.bf16.msra.mxu0 0
    %828 = vmatpush.bf16.msra.mxu0 0
    %829 = vmatpush.bf16.msra.mxu0 0
    %830 = vmatpush.bf16.msra.mxu0 %v817
    %831 = vmatpush.bf16.msra.mxu0 %v816
    %832 = vmatpush.bf16.msra.mxu0 %v815
    %833 = vmatpush.bf16.msra.mxu0 %v814
    %834 = vmatmul.bf16.gmra.mxu0 %v824
    %v835 = vpop.f32.mrf.mxu0
    %v836 = vadd.f32 %v797, %v835
    %v837 = vpop.f32.mrf.mxu0
    %v838 = vadd.f32 %v797, %v837
    %839 = vdwg.mxu0
    %v840 = vadd.f32 %v741, %v836
    %v841 = vadd.f32 %v742, %v838
    %v842 = vsel %vm96, %v840, 0.0
    %843 = vadd.xlane.f32.xlu0 %v842
    %v844 = vpop.xlane.xlu0 %843
    %v845 = vsel %vm96, %v841, 0.0
    %846 = vadd.xlane.f32.xlu0 %v845
    %v847 = vpop.xlane.xlu0 %846
    %v848 = vmul.f32 %v844, %v698
    %v849 = vmul.f32 %v847, %v698
    %v850 = vsub.f32 %v840, %v848
    %v851 = vsub.f32 %v841, %v849
    %v852 = vmul.f32 %v850, %v850
    %v853 = vmul.f32 %v851, %v851
    %v854 = vsel %vm96, %v852, 0.0
    %855 = vadd.xlane.f32.xlu0 %v854
    %v856 = vpop.xlane.xlu0 %855
    %v857 = vsel %vm96, %v853, 0.0
    %858 = vadd.xlane.f32.xlu0 %v857
    %v859 = vpop.xlane.xlu0 %858
    %v860 = vmul.f32 %v856, %v698
    %v861 = vmul.f32 %v859, %v698
    %v862 = vadd.f32 %v860, 1e-05
    %v863 = vadd.f32 %v861, 1e-05
    %v864 = vrsqrt.pop %v862
    %v865 = vmul.f32 %v864, %v862
    %v866 = vmul.f32 %v865, %v864
    %v867 = vmul.f32 0.5, %v866
    %v868 = vsub.f32 1.5, %v867
    %v869 = vmul.f32 %v864, %v868
    %vm870 = vweird.f32 %v862
    %vm871 = vweird.f32 %v864
    %vm872 = vmor %vm870, %vm871
    %v873 = vsel %vm872, %v864, %v869
    %v874 = vrsqrt.pop %v863
    %v875 = vmul.f32 %v874, %v863
    %v876 = vmul.f32 %v875, %v874
    %v877 = vmul.f32 0.5, %v876
    %v878 = vsub.f32 1.5, %v877
    %v879 = vmul.f32 %v874, %v878
    %vm880 = vweird.f32 %v863
    %vm881 = vweird.f32 %v874
    %vm882 = vmor %vm880, %vm881
    %v883 = vsel %vm882, %v874, %v879
    %v884 = vmul.f32 %v850, %v873
    %v885 = vmul.f32 %v851, %v883
    %v886 = vperm.slane %v63, 0
    %v887 = vmul.f32 %v884, %v886
    %v888 = vmul.f32 %v885, %v886
    %v889 = vperm.slane %v64, 0
    %v890 = vadd.f32 %v887, %v889
    %v891 = vadd.f32 %v888, %v889
    %892 = vst.msk [vmem:[#allocation2] sm:$0xff] %vm96, %v890
    %893 = vst.msk [vmem:[#allocation2 + $0x8] sm:$0xff] %vm96, %v891
    // Predicated region
    $region18: #{tpu_custom_call.1} parent=1 // pred_check
      _
    $region19: #{tpu_custom_call.1} parent=1 // pred_check_branch
      %895 = sbr.rel (0) target = $region21
    $region20: #{tpu_custom_call.1} parent=1 // pred_region
      %897 = vsyncadd [#allocation3], 0
      %s898 = sshll.u32 [#allocation2], 4
      %s899 = int_to_ptr.vmem [resolvable:$true] %s898
      %s900 = sshll.u32 %s4, 4
      %s901 = int_to_ptr.hbm [resolvable:$true] %s900
      %906 = dma.vmem_to_hbm [thread:$0]  %s899, 256, %s901, [#allocation3], 128, 128, 8
    $region21: #{tpu_custom_call.1} parent=1 // pred_fallthru
      _
    // Predicated region
    $region22: #{tpu_custom_call.1} parent=1 // pred_check
      _
    $region23: #{tpu_custom_call.1} parent=1 // pred_check_branch
      %908 = sbr.rel (0) target = $region25
    $region24: #{tpu_custom_call.1} parent=1 // pred_region
      %910 = dma.done [#allocation3], 256
    $region25: #{tpu_custom_call.1} parent=1 // pred_fallthru
      _
    %911 = vsyncpa [#allocation3], 1

</llo_original>
